<compile_context>
chip_gen: v7x
topology: tpu7x:2x2x1
jax: 0.10.0
libtpu: 0.0.40
codegen_flags: <defaults>
</compile_context>

<pallas_src>
import jax
import jax.numpy as jnp
from jax.experimental import pallas as pl
from jax.experimental.pallas import tpu as pltpu

INPUT_SIZE = 28 * 28       # ARGS.input_size for MNIST
NUM_CLASSES = 10           # len(ARGS.classes)
N_PAD = 128                # lane-dense output width (>= NUM_CLASSES)
TM_TARGET = 1024           # batch tile; f32 x tiles fit default scoped VMEM on v5e/v6e/v7x
MIN_TM = 512               # floor so per-step DMA stays multi-us (amortizes ~0.35us/step)


def _round_up(n, m):
    return ((n + m - 1) // m) * m


def _linear_kernel(x_ref, w_ref, b_ref, o_ref):
    # x_ref: (tm, IN) f32   w_ref: (IN, N_PAD) bf16
    # b_ref: (1, N_PAD) f32 o_ref: (tm, N_PAD) bf16
    x_bf16 = x_ref[...].astype(jnp.bfloat16)          # cast folded into kernel (VMEM only)
    acc = jnp.dot(x_bf16, w_ref[...], preferred_element_type=jnp.float32)
    o_ref[...] = (acc + b_ref[...]).astype(o_ref.dtype)


def prepare_params(weight, bias):
    """One-time parameter prep (hoisted out of the per-call path).

    weight: (NUM_CLASSES, INPUT_SIZE) f32 (PyTorch nn.Linear layout)
    bias:   (NUM_CLASSES,) f32
    returns (w_pad, b_pad) with
      w_pad: (INPUT_SIZE, N_PAD) bf16, columns >= NUM_CLASSES are zero
      b_pad: (1, N_PAD) f32, entries >= NUM_CLASSES are zero
    """
    w_pad = jnp.zeros((INPUT_SIZE, N_PAD), jnp.bfloat16)
    w_pad = w_pad.at[:, :NUM_CLASSES].set(weight.T.astype(jnp.bfloat16))
    b_pad = jnp.zeros((1, N_PAD), jnp.float32)
    b_pad = b_pad.at[0, :NUM_CLASSES].set(bias.astype(jnp.float32))
    return w_pad, b_pad


@jax.jit
def net_forward(x, w_pad, b_pad):
    """Forward pass of Net: flatten + Linear(784, 10).

    x:     (B, 1, 28, 28) float32 (NCHW, like PyTorch)
    w_pad: (INPUT_SIZE, N_PAD) bf16  (from prepare_params)
    b_pad: (1, N_PAD) float32        (from prepare_params)
    returns (B, NUM_CLASSES) float32
    """
    B = x.shape[0]
    x_flat = x.reshape(B, INPUT_SIZE)                  # torch.flatten(x, 1); stays f32

    # Batch tile: aim for >= 2 grid steps (v7x megacore), floor MIN_TM, cap
    # TM_TARGET; shrink to a sublane-aligned tile for tiny batches. No padding
    # of x: the ragged last block is handled by Pallas (masked boundary store).
    tm = min(
        TM_TARGET,
        max(MIN_TM, _round_up(pl.cdiv(B, 2), 8)),
        _round_up(B, 8),
    )
    grid = (pl.cdiv(B, tm),)

    cost = pl.CostEstimate(
        flops=2 * B * INPUT_SIZE * N_PAD,
        transcendentals=0,
        bytes_accessed=(B * INPUT_SIZE * 4             # x (f32, read once)
                        + INPUT_SIZE * N_PAD * 2       # weight (bf16)
                        + N_PAD * 4                    # bias (f32)
                        + B * N_PAD * 2),              # output (bf16)
    )

    out = pl.pallas_call(
        _linear_kernel,
        out_shape=jax.ShapeDtypeStruct((B, N_PAD), jnp.bfloat16),
        grid_spec=pltpu.PrefetchScalarGridSpec(
            num_scalar_prefetch=0,
            grid=grid,
            in_specs=[
                pl.BlockSpec((tm, INPUT_SIZE), lambda i: (i, 0)),
                pl.BlockSpec((INPUT_SIZE, N_PAD), lambda i: (0, 0)),
                pl.BlockSpec((1, N_PAD), lambda i: (0, 0)),
            ],
            out_specs=pl.BlockSpec((tm, N_PAD), lambda i: (i, 0)),
        ),
        compiler_params=pltpu.CompilerParams(
            dimension_semantics=("parallel",),          # batch axis: megacore-friendly
        ),
        cost_estimate=cost,
    )(x_flat, w_pad, b_pad)

    # Tiny slice + cast back to f32 logits (fuses into one small XLA op).
    return out[:, :NUM_CLASSES].astype(jnp.float32)


def init_params(key):
    # Deterministic init mimicking nn.Linear default: U(-1/sqrt(in), 1/sqrt(in)).
    kw, kb = jax.random.split(key)
    bound = 1.0 / jnp.sqrt(float(INPUT_SIZE))
    weight = jax.random.uniform(
        kw, (NUM_CLASSES, INPUT_SIZE), jnp.float32, minval=-bound, maxval=bound
    )
    bias = jax.random.uniform(
        kb, (NUM_CLASSES,), jnp.float32, minval=-bound, maxval=bound
    )
    return weight, bias


if __name__ == "__main__":
    key = jax.random.PRNGKey(0)
    k_in, k_p = jax.random.split(key)

    B = 2
    x = jax.random.normal(k_in, (B, 1, 28, 28), jnp.float32)
    weight, bias = init_params(k_p)

    # One-time param prep (hoisted transpose / padding / bf16 cast).
    w_pad, b_pad = prepare_params(weight, bias)

    out = net_forward(x, w_pad, b_pad)
    out = jax.block_until_ready(out)

    # Sanity check against plain-JAX f32 reference. Inputs/weights go through
    # the MXU as bf16 and logits are stored bf16, so tolerance is loosened.
    ref = x.reshape(B, -1) @ weight.T + bias
    assert out.shape == (B, NUM_CLASSES)
    assert out.dtype == jnp.float32
    assert jnp.allclose(out, ref, atol=5e-2, rtol=5e-2)

    print("KERNEL_OK")
</pallas_src>

<mosaic_0001>
module attributes {stable_mosaic.version = 11 : i64} {
  func.func @_linear_kernel(%arg0: i32, %arg1: memref<8x784xf32, #tpu.memory_space<vmem>>, %arg2: memref<784x128xbf16, #tpu.memory_space<vmem>>, %arg3: memref<1x128xf32, #tpu.memory_space<vmem>>, %arg4: memref<8x128xbf16, #tpu.memory_space<vmem>>) attributes {dimension_semantics = [#tpu.dimension_semantics<parallel>], iteration_bounds = array<i64: 1>, scalar_prefetch = 0 : i64, scratch_operands = 0 : i64, tpu.core_type = #tpu.core_type<tc>, window_params = [{transform_indices = @transform_0, window_bounds = array<i64: 8, 784>}, {pipeline_mode = #tpu.pipeline_mode<synchronous>, transform_indices = @transform_1, window_bounds = array<i64: 784, 128>}, {pipeline_mode = #tpu.pipeline_mode<synchronous>, transform_indices = @transform_2, window_bounds = array<i64: 1, 128>}, {transform_indices = @transform_3, window_bounds = array<i64: 8, 128>}]} {
    %c0 = arith.constant 0 : index
    %c0_0 = arith.constant 0 : index
    %0 = vector.load %arg1[%c0, %c0_0] : memref<8x784xf32, #tpu.memory_space<vmem>>, vector<8x784xf32>
    %1 = arith.truncf %0 : vector<8x784xf32> to vector<8x784xbf16>
    %c0_1 = arith.constant 0 : index
    %c0_2 = arith.constant 0 : index
    %2 = vector.load %arg2[%c0_1, %c0_2] : memref<784x128xbf16, #tpu.memory_space<vmem>>, vector<784x128xbf16>
    %cst = arith.constant dense<0.000000e+00> : vector<8x128xf32>
    %3 = tpu.matmul %1, %2, %cst {dimension_numbers = #tpu.dot_dimension_numbers<[1], [0], [0], [1], [0, 0, 1, 1], [], []>} : vector<8x784xbf16>, vector<784x128xbf16>, vector<8x128xf32> -> vector<8x128xf32>
    %c0_3 = arith.constant 0 : index
    %c0_4 = arith.constant 0 : index
    %4 = vector.load %arg3[%c0_3, %c0_4] : memref<1x128xf32, #tpu.memory_space<vmem>>, vector<1x128xf32>
    %5 = vector.broadcast %4 : vector<1x128xf32> to vector<8x128xf32>
    %6 = arith.addf %3, %5 : vector<8x128xf32>
    %7 = arith.truncf %6 : vector<8x128xf32> to vector<8x128xbf16>
    %c0_5 = arith.constant 0 : index
    %c0_6 = arith.constant 0 : index
    %8 = vector.load %arg4[%c0_5, %c0_6] : memref<8x128xbf16, #tpu.memory_space<vmem>>, vector<8x128xbf16>
    tpu.vector_store %arg4[%c0_5, %c0_6], %7 {strides = array<i32>} : memref<8x128xbf16, #tpu.memory_space<vmem>>, vector<8x128xbf16>,
    return
  }
  func.func @transform_0(%arg0: i32) -> (i32, i32) {
    %c0_i32 = arith.constant 0 : i32
    %c0_i32_0 = arith.constant 0 : i32
    return %arg0, %c0_i32 : i32, i32
  }
  func.func @transform_1(%arg0: i32) -> (i32, i32) {
    %c0_i32 = arith.constant 0 : i32
    %c0_i32_0 = arith.constant 0 : i32
    %c0_i32_1 = arith.constant 0 : i32
    return %c0_i32, %c0_i32_0 : i32, i32
  }
  func.func @transform_2(%arg0: i32) -> (i32, i32) {
    %c0_i32 = arith.constant 0 : i32
    %c0_i32_0 = arith.constant 0 : i32
    %c0_i32_1 = arith.constant 0 : i32
    return %c0_i32, %c0_i32_0 : i32, i32
  }
  func.func @transform_3(%arg0: i32) -> (i32, i32) {
    %c0_i32 = arith.constant 0 : i32
    %c0_i32_0 = arith.constant 0 : i32
    return %arg0, %c0_i32 : i32, i32
  }
}

</mosaic_0001>

<llo_original>
// kernel: net_forward.1
$region0: #{net_forward.1}
  #allocation0 [shape = 'u32[]', space=smem, size = 0x4, offset = 0x4, fixed_abs, tag = 'smem constant byte address 0x4 - core index']
  #allocation1 [shape = 'u32[144,128]{1,0:T(1,128)}', space=vmem, size = 0x12000, scoped, tag = 'internal scratch']
  %s0 = inlined_call_operand.vmem [shape: f32[2,784], index: 0, kind: input, shape index: {}]
  %s1 = inlined_call_operand.hbm [shape: bf16[784,128], index: 1, kind: input, shape index: {}]
  %s2 = inlined_call_operand.vmem [shape: f32[1,128], index: 2, kind: input, shape index: {}]
  %s3 = inlined_call_operand.vmem [shape: bf16[2,128], index: 3, kind: output, shape index: {}]
  %s4 = sld [smem:[#allocation0]]
  $region56: #{net_forward.1} parent=0
    _
  %s6 = ssub.s32 1, %s4
  %s7 = scalar_select 0, %s6, %s4
  $region1: #{net_forward.1} parent=0
    #allocation2 [shape = 'u8[200704]{0}', space=vmem, size = 0x31000, scoped, tag = 'input window, operand 1, single buffered']
    #allocation3 [shape = 's32[1]{0}', space=sflag, size = 0x4, scoped, tag = 'scoped memory for net_forward.1']
    #allocation4 [shape = 'u8[2048]{0}', space=vmem, size = 0x800, scoped, tag = 'output window, operand 0, single buffered']
    %8 = vsyncpa [#allocation3], 0
    // Predicated region
    $region2: #{net_forward.1} parent=1 // pred_check
      _
    $region3: #{net_forward.1} parent=1 // pred_check_branch
      %10 = sbr.rel (0) target = $region5
    $region4: #{net_forward.1} parent=1 // pred_region
      _
    $region5: #{net_forward.1} parent=1 // pred_fallthru
      _
    // Predicated region
    $region6: #{net_forward.1} parent=1 // pred_check
      _
    $region7: #{net_forward.1} parent=1 // pred_check_branch
      %12 = sbr.rel (0) target = $region9
    $region8: #{net_forward.1} parent=1 // pred_region
      %s14 = ssub.s32 6272, 6272
      %15 = vsyncadd [#allocation3], %s14
      %s16 = sshll.u32 [#allocation2], 4
      %s17 = int_to_ptr.vmem [resolvable:$true] %s16
      %22 = dma.hbm_to_vmem [thread:$0]  %s1, 6272, %s17, [#allocation3], 64, 64, 4
    $region9: #{net_forward.1} parent=1 // pred_fallthru
      _
    // Predicated region
    $region10: #{net_forward.1} parent=1 // pred_check
      _
    $region11: #{net_forward.1} parent=1 // pred_check_branch
      %24 = sbr.rel (0) target = $region13
    $region12: #{net_forward.1} parent=1 // pred_region
      _
    $region13: #{net_forward.1} parent=1 // pred_fallthru
      _
    // Predicated region
    $region14: #{net_forward.1} parent=1 // pred_check
      _
    $region15: #{net_forward.1} parent=1 // pred_check_branch
      %26 = sbr.rel (0) target = $region17
    $region16: #{net_forward.1} parent=1 // pred_region
      %27 = dma.done [#allocation3], 6272
    $region17: #{net_forward.1} parent=1 // pred_fallthru
      _
    %v29 = vld [vmem:[%s0] sm:$0xff]
    %v30 = vld [vmem:[%s0 + $0x8] sm:$0x3f]
    %v31 = vld [vmem:[%s0 + $0xe] sm:$0xff]
    %v32 = vld [vmem:[%s0 + $0x16] sm:$0x3f]
    %v33 = vld [vmem:[%s0 + $0x1c] sm:$0xff]
    %v34 = vld [vmem:[%s0 + $0x24] sm:$0x3f]
    %v35 = vld [vmem:[%s0 + $0x2a] sm:$0xff]
    %v36 = vld [vmem:[%s0 + $0x32] sm:$0x3f]
    %v45 = vcombine.low %v29, %v31
    %v46 = vcombine.high %v29, %v31
    %v47 = vcombine.low %v33, %v35
    %v48 = vcombine.high %v33, %v35
    %v50 = vunpack.c.l.s4 1983009808
    %v51 = vunpack.c.0.s8 %v50
    %v52 = vlaneseq
    %v53 = vshrl.u32 %v52, 7
    %v54 = vsub.s32 %v51, %v53
    %v55 = vrot.slane %v45, %v54
    %v57 = vunpack.c.l.s4 1983009808
    %v58 = vunpack.c.0.s8 %v57
    %v59 = vlaneseq
    %v60 = vshrl.u32 %v59, 7
    %v61 = vsub.s32 %v58, %v60
    %v62 = vrot.slane %v46, %v61
    %v64 = vunpack.c.l.s4 1983009808
    %v65 = vunpack.c.0.s8 %v64
    %v66 = vlaneseq
    %v67 = vshrl.u32 %v66, 7
    %v68 = vsub.s32 %v65, %v67
    %v69 = vrot.slane %v47, %v68
    %v71 = vunpack.c.l.s4 1983009808
    %v72 = vunpack.c.0.s8 %v71
    %v73 = vlaneseq
    %v74 = vshrl.u32 %v73, 7
    %v75 = vsub.s32 %v72, %v74
    %v76 = vrot.slane %v48, %v75
    %v77 = vcombine.low %v55, %v69
    %v78 = vcombine.high %v55, %v69
    %v79 = vcombine.low %v62, %v76
    %v80 = vcombine.high %v62, %v76
    %v81 = vcombine.low %v30, %v32
    %v82 = vcombine.high %v30, %v32
    %v83 = vcombine.low %v34, %v36
    %v84 = vcombine.high %v34, %v36
    %v86 = vunpack.c.l.s4 1983009808
    %v87 = vunpack.c.0.s8 %v86
    %v88 = vlaneseq
    %v89 = vshrl.u32 %v88, 7
    %v90 = vsub.s32 %v87, %v89
    %v91 = vrot.slane %v81, %v90
    %v93 = vunpack.c.l.s4 1983009808
    %v94 = vunpack.c.0.s8 %v93
    %v95 = vlaneseq
    %v96 = vshrl.u32 %v95, 7
    %v97 = vsub.s32 %v94, %v96
    %v98 = vrot.slane %v82, %v97
    %v100 = vunpack.c.l.s4 1983009808
    %v101 = vunpack.c.0.s8 %v100
    %v102 = vlaneseq
    %v103 = vshrl.u32 %v102, 7
    %v104 = vsub.s32 %v101, %v103
    %v105 = vrot.slane %v83, %v104
    %v107 = vunpack.c.l.s4 1983009808
    %v108 = vunpack.c.0.s8 %v107
    %v109 = vlaneseq
    %v110 = vshrl.u32 %v109, 7
    %v111 = vsub.s32 %v108, %v110
    %v112 = vrot.slane %v84, %v111
    %v113 = vcombine.low %v91, %v105
    %v114 = vcombine.high %v91, %v105
    %v115 = vcombine.low %v98, %v112
    %v123 = vpack.c.bf16 %v77, %v77
    %v124 = vpack.c.bf16 %v78, %v78
    %v125 = vpack.c.bf16 %v79, %v79
    %v126 = vpack.c.bf16 %v80, %v80
    %v127 = vpack.c.bf16 %v113, %v113
    %v128 = vpack.c.bf16 %v114, %v114
    %v129 = vpack.c.bf16 %v115, %v115
    %v130 = vld [vmem:[#allocation2] sm:$0xf]
    %v131 = vld [vmem:[#allocation2 + $0x4] sm:$0xf]
    %v132 = vld [vmem:[#allocation2 + $0x8] sm:$0xf]
    %v133 = vld [vmem:[#allocation2 + $0xc] sm:$0xf]
    %v134 = vld [vmem:[#allocation2 + $0x10] sm:$0xf]
    %v135 = vld [vmem:[#allocation2 + $0x14] sm:$0xf]
    %v136 = vld [vmem:[#allocation2 + $0x18] sm:$0xf]
    %v137 = vld [vmem:[#allocation2 + $0x1c] sm:$0xf]
    %v138 = vld [vmem:[#allocation2 + $0x20] sm:$0xf]
    %v139 = vld [vmem:[#allocation2 + $0x24] sm:$0xf]
    %v140 = vld [vmem:[#allocation2 + $0x28] sm:$0xf]
    %v141 = vld [vmem:[#allocation2 + $0x2c] sm:$0xf]
    %v142 = vld [vmem:[#allocation2 + $0x30] sm:$0xf]
    %v143 = vld [vmem:[#allocation2 + $0x34] sm:$0xf]
    %v144 = vld [vmem:[#allocation2 + $0x38] sm:$0xf]
    %v145 = vld [vmem:[#allocation2 + $0x3c] sm:$0xf]
    %v146 = vld [vmem:[#allocation2 + $0x40] sm:$0xf]
    %v147 = vld [vmem:[#allocation2 + $0x44] sm:$0xf]
    %v148 = vld [vmem:[#allocation2 + $0x48] sm:$0xf]
    %v149 = vld [vmem:[#allocation2 + $0x4c] sm:$0xf]
    %v150 = vld [vmem:[#allocation2 + $0x50] sm:$0xf]
    %v151 = vld [vmem:[#allocation2 + $0x54] sm:$0xf]
    %v152 = vld [vmem:[#allocation2 + $0x58] sm:$0xf]
    %v153 = vld [vmem:[#allocation2 + $0x5c] sm:$0xf]
    %v154 = vld [vmem:[#allocation2 + $0x60] sm:$0xf]
    %v155 = vld [vmem:[#allocation2 + $0x64] sm:$0xf]
    %v156 = vld [vmem:[#allocation2 + $0x68] sm:$0xf]
    %v157 = vld [vmem:[#allocation2 + $0x6c] sm:$0xf]
    %v158 = vld [vmem:[#allocation2 + $0x70] sm:$0xf]
    %v159 = vld [vmem:[#allocation2 + $0x74] sm:$0xf]
    %v160 = vld [vmem:[#allocation2 + $0x78] sm:$0xf]
    %v161 = vld [vmem:[#allocation2 + $0x7c] sm:$0xf]
    %v162 = vld [vmem:[#allocation2 + $0x80] sm:$0xf]
    %v163 = vld [vmem:[#allocation2 + $0x84] sm:$0xf]
    %v164 = vld [vmem:[#allocation2 + $0x88] sm:$0xf]
    %v165 = vld [vmem:[#allocation2 + $0x8c] sm:$0xf]
    %v166 = vld [vmem:[#allocation2 + $0x90] sm:$0xf]
    %v167 = vld [vmem:[#allocation2 + $0x94] sm:$0xf]
    %v168 = vld [vmem:[#allocation2 + $0x98] sm:$0xf]
    %v169 = vld [vmem:[#allocation2 + $0x9c] sm:$0xf]
    %v170 = vld [vmem:[#allocation2 + $0xa0] sm:$0xf]
    %v171 = vld [vmem:[#allocation2 + $0xa4] sm:$0xf]
    %v172 = vld [vmem:[#allocation2 + $0xa8] sm:$0xf]
    %v173 = vld [vmem:[#allocation2 + $0xac] sm:$0xf]
    %v174 = vld [vmem:[#allocation2 + $0xb0] sm:$0xf]
    %v175 = vld [vmem:[#allocation2 + $0xb4] sm:$0xf]
    %v176 = vld [vmem:[#allocation2 + $0xb8] sm:$0xf]
    %v177 = vld [vmem:[#allocation2 + $0xbc] sm:$0xf]
    %v178 = vld [vmem:[#allocation2 + $0xc0] sm:$0xf]
    %v179 = vld [vmem:[#allocation2 + $0xc4] sm:$0xf]
    %v180 = vld [vmem:[#allocation2 + $0xc8] sm:$0xf]
    %v181 = vld [vmem:[#allocation2 + $0xcc] sm:$0xf]
    %v182 = vld [vmem:[#allocation2 + $0xd0] sm:$0xf]
    %v183 = vld [vmem:[#allocation2 + $0xd4] sm:$0xf]
    %v184 = vld [vmem:[#allocation2 + $0xd8] sm:$0xf]
    %v185 = vld [vmem:[#allocation2 + $0xdc] sm:$0xf]
    %v186 = vld [vmem:[#allocation2 + $0xe0] sm:$0xf]
    %v187 = vld [vmem:[#allocation2 + $0xe4] sm:$0xf]
    %v188 = vld [vmem:[#allocation2 + $0xe8] sm:$0xf]
    %v189 = vld [vmem:[#allocation2 + $0xec] sm:$0xf]
    %v190 = vld [vmem:[#allocation2 + $0xf0] sm:$0xf]
    %v191 = vld [vmem:[#allocation2 + $0xf4] sm:$0xf]
    %v192 = vld [vmem:[#allocation2 + $0xf8] sm:$0xf]
    %v193 = vld [vmem:[#allocation2 + $0xfc] sm:$0xf]
    %v194 = vld [vmem:[#allocation2 + $0x100] sm:$0xf]
    %v195 = vld [vmem:[#allocation2 + $0x104] sm:$0xf]
    %v196 = vld [vmem:[#allocation2 + $0x108] sm:$0xf]
    %v197 = vld [vmem:[#allocation2 + $0x10c] sm:$0xf]
    %v198 = vld [vmem:[#allocation2 + $0x110] sm:$0xf]
    %v199 = vld [vmem:[#allocation2 + $0x114] sm:$0xf]
    %v200 = vld [vmem:[#allocation2 + $0x118] sm:$0xf]
    %v201 = vld [vmem:[#allocation2 + $0x11c] sm:$0xf]
    %v202 = vld [vmem:[#allocation2 + $0x120] sm:$0xf]
    %v203 = vld [vmem:[#allocation2 + $0x124] sm:$0xf]
    %v204 = vld [vmem:[#allocation2 + $0x128] sm:$0xf]
    %v205 = vld [vmem:[#allocation2 + $0x12c] sm:$0xf]
    %v206 = vld [vmem:[#allocation2 + $0x130] sm:$0xf]
    %v207 = vld [vmem:[#allocation2 + $0x134] sm:$0xf]
    %v208 = vld [vmem:[#allocation2 + $0x138] sm:$0xf]
    %v209 = vld [vmem:[#allocation2 + $0x13c] sm:$0xf]
    %v210 = vld [vmem:[#allocation2 + $0x140] sm:$0xf]
    %v211 = vld [vmem:[#allocation2 + $0x144] sm:$0xf]
    %v212 = vld [vmem:[#allocation2 + $0x148] sm:$0xf]
    %v213 = vld [vmem:[#allocation2 + $0x14c] sm:$0xf]
    %v214 = vld [vmem:[#allocation2 + $0x150] sm:$0xf]
    %v215 = vld [vmem:[#allocation2 + $0x154] sm:$0xf]
    %v216 = vld [vmem:[#allocation2 + $0x158] sm:$0xf]
    %v217 = vld [vmem:[#allocation2 + $0x15c] sm:$0xf]
    %v218 = vld [vmem:[#allocation2 + $0x160] sm:$0xf]
    %v219 = vld [vmem:[#allocation2 + $0x164] sm:$0xf]
    %v220 = vld [vmem:[#allocation2 + $0x168] sm:$0xf]
    %v221 = vld [vmem:[#allocation2 + $0x16c] sm:$0xf]
    %v222 = vld [vmem:[#allocation2 + $0x170] sm:$0xf]
    %v223 = vld [vmem:[#allocation2 + $0x174] sm:$0xf]
    %v224 = vld [vmem:[#allocation2 + $0x178] sm:$0xf]
    %v225 = vld [vmem:[#allocation2 + $0x17c] sm:$0xf]
    %v226 = vld [vmem:[#allocation2 + $0x180] sm:$0xf]
    %v227 = vld [vmem:[#allocation2 + $0x184] sm:$0xf]
    %v228 = vld [vmem:[%s2] sm:$0x1]
    %v230 = vlaneseq
    %v231 = vshrl.u32 %v230, 7
    %v232 = vsub.s32 0, %v231
    %v233 = vrot.slane %v228, %v232
    %v333 = vunpack.c.l.b16 %v130
    %v334 = vunpack.c.l.b16 %v131
    %v335 = vunpack.c.l.b16 %v132
    %v336 = vunpack.c.l.b16 %v133
    %v337 = vunpack.c.l.b16 %v134
    %v338 = vunpack.c.l.b16 %v135
    %v339 = vunpack.c.l.b16 %v136
    %v340 = vunpack.c.l.b16 %v137
    %v341 = vunpack.c.l.b16 %v138
    %v342 = vunpack.c.l.b16 %v139
    %v343 = vunpack.c.l.b16 %v140
    %v344 = vunpack.c.l.b16 %v141
    %v345 = vunpack.c.l.b16 %v142
    %v346 = vunpack.c.l.b16 %v143
    %v347 = vunpack.c.l.b16 %v144
    %v348 = vunpack.c.l.b16 %v145
    %v349 = vunpack.c.l.b16 %v146
    %v350 = vunpack.c.l.b16 %v147
    %v351 = vunpack.c.l.b16 %v148
    %v352 = vunpack.c.l.b16 %v149
    %v353 = vunpack.c.l.b16 %v150
    %v354 = vunpack.c.l.b16 %v151
    %v355 = vunpack.c.l.b16 %v152
    %v356 = vunpack.c.l.b16 %v153
    %v357 = vunpack.c.l.b16 %v154
    %v358 = vunpack.c.l.b16 %v155
    %v359 = vunpack.c.l.b16 %v156
    %v360 = vunpack.c.l.b16 %v157
    %v361 = vunpack.c.l.b16 %v158
    %v362 = vunpack.c.l.b16 %v159
    %v363 = vunpack.c.l.b16 %v160
    %v364 = vunpack.c.l.b16 %v161
    %v365 = vunpack.c.l.b16 %v162
    %v366 = vunpack.c.l.b16 %v163
    %v367 = vunpack.c.l.b16 %v164
    %v368 = vunpack.c.l.b16 %v165
    %v369 = vunpack.c.l.b16 %v166
    %v370 = vunpack.c.l.b16 %v167
    %v371 = vunpack.c.l.b16 %v168
    %v372 = vunpack.c.l.b16 %v169
    %v373 = vunpack.c.l.b16 %v170
    %v374 = vunpack.c.l.b16 %v171
    %v375 = vunpack.c.l.b16 %v172
    %v376 = vunpack.c.l.b16 %v173
    %v377 = vunpack.c.l.b16 %v174
    %v378 = vunpack.c.l.b16 %v175
    %v379 = vunpack.c.l.b16 %v176
    %v380 = vunpack.c.l.b16 %v177
    %v381 = vunpack.c.l.b16 %v178
    %v382 = vunpack.c.l.b16 %v179
    %v383 = vunpack.c.l.b16 %v180
    %v384 = vunpack.c.l.b16 %v181
    %v385 = vunpack.c.l.b16 %v182
    %v386 = vunpack.c.l.b16 %v183
    %v387 = vunpack.c.l.b16 %v184
    %v388 = vunpack.c.l.b16 %v185
    %v389 = vunpack.c.l.b16 %v186
    %v390 = vunpack.c.l.b16 %v187
    %v391 = vunpack.c.l.b16 %v188
    %v392 = vunpack.c.l.b16 %v189
    %v393 = vunpack.c.l.b16 %v190
    %v394 = vunpack.c.l.b16 %v191
    %v395 = vunpack.c.l.b16 %v192
    %v396 = vunpack.c.l.b16 %v193
    %v397 = vunpack.c.l.b16 %v194
    %v398 = vunpack.c.l.b16 %v195
    %v399 = vunpack.c.l.b16 %v196
    %v400 = vunpack.c.l.b16 %v197
    %v401 = vunpack.c.l.b16 %v198
    %v402 = vunpack.c.l.b16 %v199
    %v403 = vunpack.c.l.b16 %v200
    %v404 = vunpack.c.l.b16 %v201
    %v405 = vunpack.c.l.b16 %v202
    %v406 = vunpack.c.l.b16 %v203
    %v407 = vunpack.c.l.b16 %v204
    %v408 = vunpack.c.l.b16 %v205
    %v409 = vunpack.c.l.b16 %v206
    %v410 = vunpack.c.l.b16 %v207
    %v411 = vunpack.c.l.b16 %v208
    %v412 = vunpack.c.l.b16 %v209
    %v413 = vunpack.c.l.b16 %v210
    %v414 = vunpack.c.l.b16 %v211
    %v415 = vunpack.c.l.b16 %v212
    %v416 = vunpack.c.l.b16 %v213
    %v417 = vunpack.c.l.b16 %v214
    %v418 = vunpack.c.l.b16 %v215
    %v419 = vunpack.c.l.b16 %v216
    %v420 = vunpack.c.l.b16 %v217
    %v421 = vunpack.c.l.b16 %v218
    %v422 = vunpack.c.l.b16 %v219
    %v423 = vunpack.c.l.b16 %v220
    %v424 = vunpack.c.l.b16 %v221
    %v425 = vunpack.c.l.b16 %v222
    %v426 = vunpack.c.l.b16 %v223
    %v427 = vunpack.c.l.b16 %v224
    %v428 = vunpack.c.l.b16 %v225
    %v429 = vunpack.c.l.b16 %v226
    %v430 = vunpack.c.l.b16 %v227
    %v431 = vpack.c.b16 %v334, %v333
    %v432 = vpack.c.b16 %v336, %v335
    %v433 = vpack.c.b16 %v338, %v337
    %v434 = vpack.c.b16 %v340, %v339
    %v435 = vpack.c.b16 %v342, %v341
    %v436 = vpack.c.b16 %v344, %v343
    %v437 = vpack.c.b16 %v346, %v345
    %v438 = vpack.c.b16 %v348, %v347
    %v439 = vpack.c.b16 %v350, %v349
    %v440 = vpack.c.b16 %v352, %v351
    %v441 = vpack.c.b16 %v354, %v353
    %v442 = vpack.c.b16 %v356, %v355
    %v443 = vpack.c.b16 %v358, %v357
    %v444 = vpack.c.b16 %v360, %v359
    %v445 = vpack.c.b16 %v362, %v361
    %v446 = vpack.c.b16 %v364, %v363
    %v447 = vpack.c.b16 %v366, %v365
    %v448 = vpack.c.b16 %v368, %v367
    %v449 = vpack.c.b16 %v370, %v369
    %v450 = vpack.c.b16 %v372, %v371
    %v451 = vpack.c.b16 %v374, %v373
    %v452 = vpack.c.b16 %v376, %v375
    %v453 = vpack.c.b16 %v378, %v377
    %v454 = vpack.c.b16 %v380, %v379
    %v455 = vpack.c.b16 %v382, %v381
    %v456 = vpack.c.b16 %v384, %v383
    %v457 = vpack.c.b16 %v386, %v385
    %v458 = vpack.c.b16 %v388, %v387
    %v459 = vpack.c.b16 %v390, %v389
    %v460 = vpack.c.b16 %v392, %v391
    %v461 = vpack.c.b16 %v394, %v393
    %v462 = vpack.c.b16 %v396, %v395
    %v463 = vpack.c.b16 %v398, %v397
    %v464 = vpack.c.b16 %v400, %v399
    %v465 = vpack.c.b16 %v402, %v401
    %v466 = vpack.c.b16 %v404, %v403
    %v467 = vpack.c.b16 %v406, %v405
    %v468 = vpack.c.b16 %v408, %v407
    %v469 = vpack.c.b16 %v410, %v409
    %v470 = vpack.c.b16 %v412, %v411
    %v471 = vpack.c.b16 %v414, %v413
    %v472 = vpack.c.b16 %v416, %v415
    %v473 = vpack.c.b16 %v418, %v417
    %v474 = vpack.c.b16 %v420, %v419
    %v475 = vpack.c.b16 %v422, %v421
    %v476 = vpack.c.b16 %v424, %v423
    %v477 = vpack.c.b16 %v426, %v425
    %v478 = vpack.c.b16 %v428, %v427
    %v479 = vpack.c.b16 %v430, %v429
    %vm529 = vcmask 130048
    %v531 = vsel %vm529, %v129, 0
    %533 = vmatprep.subr.bf16.mxu0 0
    %534 = vmatpush1.bf16.msra.mxu0 %v431
    %535 = vmatprep.subr.bf16.mxu0 0
    %536 = vmatpush1.bf16.msra.mxu0 %v432
    %537 = vmatprep.subr.bf16.mxu0 0
    %538 = vmatpush1.bf16.msra.mxu0 %v433
    %539 = vmatprep.subr.bf16.mxu0 0
    %540 = vmatpush1.bf16.msra.mxu0 %v434
    %541 = vmatprep.subr.bf16.mxu0 0
    %542 = vmatpush1.bf16.msra.mxu0 %v435
    %543 = vmatprep.subr.bf16.mxu0 0
    %544 = vmatpush1.bf16.msra.mxu0 %v436
    %545 = vmatprep.subr.bf16.mxu0 0
    %546 = vmatpush1.bf16.msra.mxu0 %v437
    %547 = vmatprep.subr.bf16.mxu0 0
    %548 = vmatpush1.bf16.msra.mxu0 %v438
    %549 = vmatprep.subr.bf16.mxu0 0
    %550 = vmatpush1.bf16.msra.mxu0 %v439
    %551 = vmatprep.subr.bf16.mxu0 0
    %552 = vmatpush1.bf16.msra.mxu0 %v440
    %553 = vmatprep.subr.bf16.mxu0 0
    %554 = vmatpush1.bf16.msra.mxu0 %v441
    %555 = vmatprep.subr.bf16.mxu0 0
    %556 = vmatpush1.bf16.msra.mxu0 %v442
    %557 = vmatprep.subr.bf16.mxu0 0
    %558 = vmatpush1.bf16.msra.mxu0 %v443
    %559 = vmatprep.subr.bf16.mxu0 0
    %560 = vmatpush1.bf16.msra.mxu0 %v444
    %561 = vmatprep.subr.bf16.mxu0 0
    %562 = vmatpush1.bf16.msra.mxu0 %v445
    %563 = vmatprep.subr.bf16.mxu0 0
    %564 = vmatpush1.bf16.msra.mxu0 %v446
    %565 = vmatprep.mubr.bf16.mxu0 %v124
    %566 = vmatmul.mubr.bf16.gmra.mrb[0].mxu0 %v123
    %v567 = vpop.f32.mrb[0].mxu0
    %v568 = vadd.f32 %v233, %v567
    %v569 = vpop.f32.mrb[0].mxu0
    %v570 = vpop.f32.mrb[0].mxu0
    %v571 = vpop.f32.mrb[0].mxu0
    %572 = vdwg.mxu0
    %573 = vmatprep.subr.bf16.mxu0 0
    %574 = vmatpush1.bf16.msra.mxu0 %v447
    %575 = vmatprep.subr.bf16.mxu0 0
    %576 = vmatpush1.bf16.msra.mxu0 %v448
    %577 = vmatprep.subr.bf16.mxu0 0
    %578 = vmatpush1.bf16.msra.mxu0 %v449
    %579 = vmatprep.subr.bf16.mxu0 0
    %580 = vmatpush1.bf16.msra.mxu0 %v450
    %581 = vmatprep.subr.bf16.mxu0 0
    %582 = vmatpush1.bf16.msra.mxu0 %v451
    %583 = vmatprep.subr.bf16.mxu0 0
    %584 = vmatpush1.bf16.msra.mxu0 %v452
    %585 = vmatprep.subr.bf16.mxu0 0
    %586 = vmatpush1.bf16.msra.mxu0 %v453
    %587 = vmatprep.subr.bf16.mxu0 0
    %588 = vmatpush1.bf16.msra.mxu0 %v454
    %589 = vmatprep.subr.bf16.mxu0 0
    %590 = vmatpush1.bf16.msra.mxu0 %v455
    %591 = vmatprep.subr.bf16.mxu0 0
    %592 = vmatpush1.bf16.msra.mxu0 %v456
    %593 = vmatprep.subr.bf16.mxu0 0
    %594 = vmatpush1.bf16.msra.mxu0 %v457
    %595 = vmatprep.subr.bf16.mxu0 0
    %596 = vmatpush1.bf16.msra.mxu0 %v458
    %597 = vmatprep.subr.bf16.mxu0 0
    %598 = vmatpush1.bf16.msra.mxu0 %v459
    %599 = vmatprep.subr.bf16.mxu0 0
    %600 = vmatpush1.bf16.msra.mxu0 %v460
    %601 = vmatprep.subr.bf16.mxu0 0
    %602 = vmatpush1.bf16.msra.mxu0 %v461
    %603 = vmatprep.subr.bf16.mxu0 0
    %604 = vmatpush1.bf16.msra.mxu0 %v462
    %605 = vmatprep.mubr.bf16.mxu0 %v126
    %606 = vmatmul.mubr.bf16.gmra.mrb[0].mxu0 %v125
    %v607 = vpop.f32.mrb[0].mxu0
    %v608 = vadd.f32 %v568, %v607
    %v609 = vpop.f32.mrb[0].mxu0
    %v610 = vpop.f32.mrb[0].mxu0
    %v611 = vpop.f32.mrb[0].mxu0
    %612 = vdwg.mxu0
    %613 = vmatprep.subr.bf16.mxu0 0
    %614 = vmatpush1.bf16.msra.mxu0 %v463
    %615 = vmatprep.subr.bf16.mxu0 0
    %616 = vmatpush1.bf16.msra.mxu0 %v464
    %617 = vmatprep.subr.bf16.mxu0 0
    %618 = vmatpush1.bf16.msra.mxu0 %v465
    %619 = vmatprep.subr.bf16.mxu0 0
    %620 = vmatpush1.bf16.msra.mxu0 %v466
    %621 = vmatprep.subr.bf16.mxu0 0
    %622 = vmatpush1.bf16.msra.mxu0 %v467
    %623 = vmatprep.subr.bf16.mxu0 0
    %624 = vmatpush1.bf16.msra.mxu0 %v468
    %625 = vmatprep.subr.bf16.mxu0 0
    %626 = vmatpush1.bf16.msra.mxu0 %v469
    %627 = vmatprep.subr.bf16.mxu0 0
    %628 = vmatpush1.bf16.msra.mxu0 %v470
    %629 = vmatprep.subr.bf16.mxu0 0
    %630 = vmatpush1.bf16.msra.mxu0 %v471
    %631 = vmatprep.subr.bf16.mxu0 0
    %632 = vmatpush1.bf16.msra.mxu0 %v472
    %633 = vmatprep.subr.bf16.mxu0 0
    %634 = vmatpush1.bf16.msra.mxu0 %v473
    %635 = vmatprep.subr.bf16.mxu0 0
    %636 = vmatpush1.bf16.msra.mxu0 %v474
    %637 = vmatprep.subr.bf16.mxu0 0
    %638 = vmatpush1.bf16.msra.mxu0 %v475
    %639 = vmatprep.subr.bf16.mxu0 0
    %640 = vmatpush1.bf16.msra.mxu0 %v476
    %641 = vmatprep.subr.bf16.mxu0 0
    %642 = vmatpush1.bf16.msra.mxu0 %v477
    %643 = vmatprep.subr.bf16.mxu0 0
    %644 = vmatpush1.bf16.msra.mxu0 %v478
    %645 = vmatprep.mubr.bf16.mxu0 %v128
    %646 = vmatmul.mubr.bf16.gmra.mrb[0].mxu0 %v127
    %v647 = vpop.f32.mrb[0].mxu0
    %v648 = vadd.f32 %v608, %v647
    %v649 = vpop.f32.mrb[0].mxu0
    %v650 = vpop.f32.mrb[0].mxu0
    %v651 = vpop.f32.mrb[0].mxu0
    %652 = vdwg.mxu0
    %653 = vmatprep.subr.bf16.mxu0 0
    %654 = vmatpush1.bf16.msra.mxu0 %v479
    %655 = vmatprep.subr.bf16.mxu0 0
    %656 = vmatpush1.bf16.msra.mxu0 0
    %657 = vmatprep.subr.bf16.mxu0 0
    %658 = vmatpush1.bf16.msra.mxu0 0
    %659 = vmatprep.subr.bf16.mxu0 0
    %660 = vmatpush1.bf16.msra.mxu0 0
    %661 = vmatprep.subr.bf16.mxu0 0
    %662 = vmatpush1.bf16.msra.mxu0 0
    %663 = vmatprep.subr.bf16.mxu0 0
    %664 = vmatpush1.bf16.msra.mxu0 0
    %665 = vmatprep.subr.bf16.mxu0 0
    %666 = vmatpush1.bf16.msra.mxu0 0
    %667 = vmatprep.subr.bf16.mxu0 0
    %668 = vmatpush1.bf16.msra.mxu0 0
    %669 = vmatprep.subr.bf16.mxu0 0
    %670 = vmatpush1.bf16.msra.mxu0 0
    %671 = vmatprep.subr.bf16.mxu0 0
    %672 = vmatpush1.bf16.msra.mxu0 0
    %673 = vmatprep.subr.bf16.mxu0 0
    %674 = vmatpush1.bf16.msra.mxu0 0
    %675 = vmatprep.subr.bf16.mxu0 0
    %676 = vmatpush1.bf16.msra.mxu0 0
    %677 = vmatprep.subr.bf16.mxu0 0
    %678 = vmatpush1.bf16.msra.mxu0 0
    %679 = vmatprep.subr.bf16.mxu0 0
    %680 = vmatpush1.bf16.msra.mxu0 0
    %681 = vmatprep.subr.bf16.mxu0 0
    %682 = vmatpush1.bf16.msra.mxu0 0
    %683 = vmatprep.subr.bf16.mxu0 0
    %684 = vmatpush1.bf16.msra.mxu0 0
    %685 = vmatprep.mubr.bf16.mxu0 0
    %686 = vmatmul.mubr.bf16.gmra.mrb[0].mxu0 %v531
    %v687 = vpop.f32.mrb[0].mxu0
    %v688 = vadd.f32 %v648, %v687
    %v689 = vpop.f32.mrb[0].mxu0
    %v690 = vpop.f32.mrb[0].mxu0
    %v691 = vpop.f32.mrb[0].mxu0
    %692 = vdwg.mxu0
    %v693 = vpack.c.bf16 %v688, %v688
    %v696 = vunpack.c.l.s4 1966171168
    %v697 = vunpack.c.0.s8 %v696
    %v698 = vlaneseq
    %v699 = vshrl.u32 %v698, 7
    %v700 = vsub.s32 %v697, %v699
    %v701 = vrot.slane %v693, %v700
    %v702 = vcombine.high %v701, %v701
    %v704 = vunpack.c.l.s4 1966171168
    %v705 = vunpack.c.0.s8 %v704
    %v706 = vlaneseq
    %v707 = vshrl.u32 %v706, 7
    %v708 = vsub.s32 %v705, %v707
    %v709 = vrot.slane %v701, %v708
    %v711 = vunpack.c.l.s4 1966171168
    %v712 = vunpack.c.0.s8 %v711
    %v713 = vlaneseq
    %v714 = vshrl.u32 %v713, 7
    %v715 = vsub.s32 %v712, %v714
    %v716 = vrot.slane %v702, %v715
    %v717 = vcombine.high %v709, %v709
    %v718 = vcombine.high %v716, %v716
    %723 = vst [vmem:[#allocation4] sm:$0x1] %v709
    %724 = vst [vmem:[#allocation4 + $0x1] sm:$0x1] %v716
    %725 = vst [vmem:[#allocation4 + $0x2] sm:$0x1] %v717
    %726 = vst [vmem:[#allocation4 + $0x3] sm:$0x1] %v718
    // Predicated region
    $region18: #{net_forward.1} parent=1 // pred_check
      _
    $region19: #{net_forward.1} parent=1 // pred_check_branch
      %728 = sbr.rel (0) target = $region21
    $region20: #{net_forward.1} parent=1 // pred_region
      // Predicated region
      $region22: #{net_forward.1} parent=20 // pred_check
        _
      $region23: #{net_forward.1} parent=20 // pred_check_branch
        %730 = sbr.rel (0) target = $region25
      $region24: #{net_forward.1} parent=20 // pred_region
        // Predicated region
        $region26: #{net_forward.1} parent=24 // pred_check
          _
        $region27: #{net_forward.1} parent=24 // pred_check_branch
          %732 = sbr.rel target = $region29
        $region28: #{net_forward.1} parent=24 // pred_region
          // Predicated region
          $region41: #{net_forward.1} parent=28 // pred_check
            _
          $region42: #{net_forward.1} parent=28 // pred_check_branch
            %747 = sbr.rel (0) target = $region44
          $region43: #{net_forward.1} parent=28 // pred_region
            loop: start=0, step=1, limit=1
            $region45: #{net_forward.1} parent=43 // loop_pre_header
              _
            $region46: #{net_forward.1} parent=43 // loop_header
              %s750 = sphi 0, %s754
              %p751 = scmp.ge.s32.totalorder %s750, 1
              %s755 = sphi [#allocation4], [#allocation4]
              %s756 = sphi %s3, %s3
            $region47: #{net_forward.1} parent=43 // loop_header_branch
              %753 = sbr.rel (%p751) target = $region51
            $region48: #{net_forward.1} parent=43 // loop_body
              %v757 = vld [vmem:[%s755] sm:$0x1]
              %758 = vst [vmem:[%s756] sm:$0x1] %v757
            $region49: #{net_forward.1} parent=43 // loop_footer
              %s754 = sadd.s32 1, %s750
            $region50: #{net_forward.1} parent=43 // loop_footer_branch
              %749 = sbr.rel target = $region46
            $region51: #{net_forward.1} parent=43 // loop_exit
              _
          $region44: #{net_forward.1} parent=28 // pred_fallthru
            _
        $region29: #{net_forward.1} parent=24 // pred_fallthru
          _
        // Predicated region
        $region30: #{net_forward.1} parent=24 // pred_check
          _
        $region31: #{net_forward.1} parent=24 // pred_check_branch
          %734 = sbr.rel (0) target = $region33
        $region32: #{net_forward.1} parent=24 // pred_region
          loop: start=0, step=1, limit=1
          $region34: #{net_forward.1} parent=32 // loop_pre_header
            _
          $region35: #{net_forward.1} parent=32 // loop_header
            %s737 = sphi 0, %s741
            %p738 = scmp.ge.s32.totalorder %s737, 1
            %s742 = sphi [#allocation4], [#allocation4]
            %s743 = sphi %s3, %s3
          $region36: #{net_forward.1} parent=32 // loop_header_branch
            %740 = sbr.rel (%p738) target = $region40
          $region37: #{net_forward.1} parent=32 // loop_body
            %v744 = vld [vmem:[%s742] sm:$0x1]
            %745 = vst [vmem:[%s743] sm:$0x1] %v744
          $region38: #{net_forward.1} parent=32 // loop_footer
            %s741 = sadd.s32 1, %s737
          $region39: #{net_forward.1} parent=32 // loop_footer_branch
            %736 = sbr.rel target = $region35
          $region40: #{net_forward.1} parent=32 // loop_exit
            _
        $region33: #{net_forward.1} parent=24 // pred_fallthru
          _
      $region25: #{net_forward.1} parent=20 // pred_fallthru
        _
      %759 = vnop
    $region21: #{net_forward.1} parent=1 // pred_fallthru
      _
    // Predicated region
    $region52: #{net_forward.1} parent=1 // pred_check
      _
    $region53: #{net_forward.1} parent=1 // pred_check_branch
      %761 = sbr.rel (0) target = $region55
    $region54: #{net_forward.1} parent=1 // pred_region
      _
    $region55: #{net_forward.1} parent=1 // pred_fallthru
      _
    %762 = vsyncpa [#allocation3], 1

</llo_original>
